<compile_context>
chip_gen: v7x
topology: tpu7x:2x2x1
jax: 0.10.0
libtpu: 0.0.40
codegen_flags: <defaults>
</compile_context>

<pallas_src>
import functools

import jax
import jax.numpy as jnp
from jax import lax
from jax.experimental import pallas as pl
from jax.experimental.pallas import tpu as pltpu

_LANES = 128
_ROW_PACK = 32          # slab rows padded to a multiple of this (f32/bf16/int8 safe)


def _artery_loss_kernel(counts_ref, p_ref, t_ref, ploc_ref, tloc_ref, out_ref,
                        *, assume_hard_labels):
    c = pl.program_id(0)                 # core index   ("parallel")
    i = pl.program_id(1)                 # tile index   ("arbitrary" reduction)
    n_inner = pl.num_programs(1)
    lt = c * n_inner + i                 # logical (unclamped) tile index

    @pl.when(i == 0)
    def _init():
        out_ref[...] = jnp.zeros_like(out_ref)

    tc = p_ref.shape[0]                  # conf rows per tile (multiple of 8)
    tl = ploc_ref.shape[0]               # loc rows per tile  (multiple of 8)
    rows_conf = counts_ref[0]
    rows_loc = counts_ref[1]

    # ---------------- confidence / weighted BCE ----------------------------
    row_c = lax.broadcasted_iota(jnp.int32, (tc, _LANES), 0)
    valid_c = (lt * tc + row_c) < rows_conf        # False on OOB / overflow rows

    p_raw = p_ref[...].astype(jnp.float32)
    t_raw = t_ref[...].astype(jnp.float32)
    # Keep log() inputs inside (0, 1] on garbage (out-of-bounds) rows so no
    # NaN/Inf ever reaches the accumulators; masked rows contribute exactly 0.
    p = jnp.where(valid_c, p_raw, 1.0)
    t = jnp.where(valid_c, t_raw, 1.0)

    if assume_hard_labels:
        # Single-log variant (only valid for hard 0/1 labels).
        p_sel = jnp.where(valid_c, jnp.where(t > 0.5, p, 1.0 - p), 1.0)
        bce = -jnp.maximum(jnp.log(p_sel), -100.0)
    else:
        # nn.BCELoss(reduction='none') with PyTorch's log clamp at -100.
        log_p = jnp.maximum(jnp.log(p), -100.0)
        log_1mp = jnp.maximum(jnp.log(1.0 - p), -100.0)
        bce = -(t * log_p + (1.0 - t) * log_1mp)

    pos_mask = jnp.where(valid_c & (t_raw > 0.5), 1.0, 0.0)
    wbce = bce * (1.0 + 2.0 * pos_mask)            # sample_weight = 3 if pos else 1

    # (T,128) -> (T//8,8,128) is layout-preserving; sum(axis=0) is pure VALU.
    out_ref[0, 0] += wbce.reshape(tc // 8, 8, _LANES).sum(axis=0)
    out_ref[0, 1] += pos_mask.reshape(tc // 8, 8, _LANES).sum(axis=0)

    # ---------------- localisation / L1 ------------------------------------
    row_l = lax.broadcasted_iota(jnp.int32, (tl, _LANES), 0)
    valid_l = (lt * tl + row_l) < rows_loc
    diff = jnp.abs(ploc_ref[...].astype(jnp.float32)
                   - tloc_ref[...].astype(jnp.float32))
    diff = jnp.where(valid_l, diff, 0.0)
    out_ref[0, 2] += diff.reshape(tl // 8, 8, _LANES).sum(axis=0)


def _lane_slab(x):
    """Flatten x into a lane-dense (rows, 128) slab in its native dtype.

    The reshape is metadata-only; a zero-pad copy is made only when the
    flattened length is not already a multiple of 32*128 elements.
    """
    flat = x.reshape(-1)
    n = flat.shape[0]
    chunk = _ROW_PACK * _LANES
    padded = pl.cdiv(n, chunk) * chunk
    if padded != n:
        # TODO(synk): a fully copy-free ragged path would need 1-D blocks or a
        # manual-DMA tail; this pad only triggers when numel % 4096 != 0.
        flat = jnp.pad(flat, (0, padded - n))
    return flat.reshape(padded // _LANES, _LANES)


def custom_artery_loss(pred_locs, pred_conf, target_locs, target_conf, *,
                       max_conf_tile_rows=2048, num_cores=2,
                       assume_hard_labels=False):
    """Returns (total_loss, conf_loss, loc_loss) as f32 scalars."""
    n_conf = pred_conf.size                         # BCE mean divisor (B * 1)

    p2 = _lane_slab(pred_conf)
    t2 = _lane_slab(target_conf)
    ploc2 = _lane_slab(pred_locs)
    tloc2 = _lane_slab(target_locs)
    rows_c = p2.shape[0]
    rows_l = ploc2.shape[0]

    # Tile sizes (conf rows; loc tile is 3x), multiples of 32 rows, clamped so
    # double-buffered input blocks stay well inside scoped VMEM on every chip.
    t_req = max(_ROW_PACK, pl.cdiv(max_conf_tile_rows, _ROW_PACK) * _ROW_PACK)

    def _block_bytes(tr):
        tcb = min(rows_c, tr)
        tlb = min(rows_l, 3 * tr)
        return (tcb * _LANES * (p2.dtype.itemsize + t2.dtype.itemsize)
                + tlb * _LANES * (ploc2.dtype.itemsize + tloc2.dtype.itemsize))

    while 2 * _block_bytes(t_req) > (44 << 20) and t_req > _ROW_PACK:
        t_req = max(_ROW_PACK, (t_req // 2 // _ROW_PACK) * _ROW_PACK)

    tile_c = min(rows_c, t_req)
    tile_l = min(rows_l, 3 * t_req)

    num_tiles = max(pl.cdiv(rows_c, tile_c), pl.cdiv(rows_l, tile_l))
    ncores = max(1, min(num_cores, num_tiles))
    tiles_per_core = pl.cdiv(num_tiles, ncores)
    last_tile = num_tiles - 1

    def in_index_map(c, i, counts):
        # Clamp so the input DMA window always stays in-bounds; the duplicate
        # (overflow) tile on the last core is zeroed by the in-kernel row mask.
        return (jnp.minimum(c * tiles_per_core + i, last_tile), 0)

    def out_index_map(c, i, counts):
        return (c, 0, 0, 0)

    counts = jnp.array([rows_c, rows_l], dtype=jnp.int32)
    vmem_limit = int(min(max(2 * _block_bytes(t_req) + (8 << 20), 32 << 20),
                         60 << 20))

    kernel = functools.partial(_artery_loss_kernel,
                               assume_hard_labels=bool(assume_hard_labels))

    out = pl.pallas_call(
        kernel,
        out_shape=jax.ShapeDtypeStruct((ncores, 3, 8, _LANES), jnp.float32),
        grid_spec=pltpu.PrefetchScalarGridSpec(
            num_scalar_prefetch=1,
            grid=(ncores, tiles_per_core),
            in_specs=[
                pl.BlockSpec((tile_c, _LANES), in_index_map),
                pl.BlockSpec((tile_c, _LANES), in_index_map),
                pl.BlockSpec((tile_l, _LANES), in_index_map),
                pl.BlockSpec((tile_l, _LANES), in_index_map),
            ],
            out_specs=pl.BlockSpec((1, 3, 8, _LANES), out_index_map),
        ),
        compiler_params=pltpu.CompilerParams(
            dimension_semantics=("parallel", "arbitrary"),
            vmem_limit_bytes=vmem_limit),
    )(counts, p2, t2, ploc2, tloc2)

    part = out.sum(axis=(0, 2, 3))                  # [bce_sum, pos_sum, abs_sum]
    bce_sum, pos_sum, abs_sum = part[0], part[1], part[2]
    conf_loss = bce_sum / jnp.float32(n_conf)
    # Matches the literal PyTorch broadcast:
    #   ([B,3] * [B,1,1]).sum() == pos_mask.sum() * |pred - target|.sum()
    loc_loss = (pos_sum * abs_sum) / (pos_sum + 1e-6)
    total = conf_loss + loc_loss
    return total, conf_loss, loc_loss


def _reference(pred_locs, pred_conf, target_locs, target_conf,
               materialize_broadcast=False):
    """Pure-JAX reference mirroring the PyTorch module."""
    p = pred_conf.astype(jnp.float32)
    t = target_conf.astype(jnp.float32)
    lp = pred_locs.astype(jnp.float32)
    lt = target_locs.astype(jnp.float32)
    bce = -(t * jnp.maximum(jnp.log(p), -100.0)
            + (1.0 - t) * jnp.maximum(jnp.log(1.0 - p), -100.0))
    w = jnp.where(t > 0.5, 3.0, 1.0)
    conf_loss = jnp.mean(bce * w)
    pos_mask = (t > 0.5).astype(jnp.float32)                 # [B,1]
    l1 = jnp.abs(lp - lt)                                    # [B,3]
    if materialize_broadcast:
        big = l1[None, :, :] * pos_mask[:, :, None]          # literal [B,B,3]
        num = big.sum()
    else:
        num = pos_mask.sum() * l1.sum()                      # same value, factorized
    loc_loss = num / (pos_mask.sum() + 1e-6)
    return conf_loss + loc_loss, conf_loss, loc_loss


if __name__ == "__main__":
    def _make_inputs(B, seed, dtype=jnp.float32):
        key = jax.random.PRNGKey(seed)
        k1, k2, k3, k4 = jax.random.split(key, 4)
        pred_locs = jax.random.uniform(k1, (B, 3), jnp.float32)
        pred_conf = jax.nn.sigmoid(jax.random.normal(k2, (B, 1), jnp.float32))
        target_locs = jax.random.uniform(k3, (B, 3), jnp.float32)
        target_conf = (jax.random.uniform(k4, (B, 1), jnp.float32) > 0.5
                       ).astype(jnp.float32)
        return tuple(a.astype(dtype)
                     for a in (pred_locs, pred_conf, target_locs, target_conf))

    # 1) Small case at the module's natural scale; literal [B,B,3] broadcast ref.
    args = _make_inputs(8, 0)
    res = custom_artery_loss(*args)
    jax.block_until_ready(res)
    ref = _reference(*args, materialize_broadcast=True)
    for a, b in zip(res, ref):
        assert jnp.allclose(a, b, rtol=1e-5, atol=1e-5), (a, b)

    # 1b) Hard-label single-log fast path (targets are hard 0/1 here).
    res_h = custom_artery_loss(*args, assume_hard_labels=True)
    jax.block_until_ready(res_h)
    for a, b in zip(res_h, ref):
        assert jnp.allclose(a, b, rtol=1e-5, atol=1e-5), (a, b)

    # 2) Copy-free multi-tile dual-core path (numel % 4096 == 0, odd tile count
    #    so the second core gets a clamped+masked overflow tile).
    args = _make_inputs(12288, 1)
    res = custom_artery_loss(*args, max_conf_tile_rows=32)
    jax.block_until_ready(res)
    ref = _reference(*args)
    for a, b in zip(res, ref):
        assert jnp.allclose(a, b, rtol=5e-4, atol=1e-4), (a, b)

    # 3) Ragged path: zero-pad fallback + partial last loc block + overflow tile.
    args = _make_inputs(9000, 2)
    res = custom_artery_loss(*args, max_conf_tile_rows=32)
    jax.block_until_ready(res)
    ref = _reference(*args)
    for a, b in zip(res, ref):
        assert jnp.allclose(a, b, rtol=5e-4, atol=1e-4), (a, b)

    # 4) Native-dtype (bf16) DMA path with in-kernel f32 upcast.
    args = _make_inputs(8, 3, dtype=jnp.bfloat16)
    res = custom_artery_loss(*args)
    jax.block_until_ready(res)
    ref = _reference(*args)
    for a, b in zip(res, ref):
        assert jnp.allclose(a, b, rtol=1e-3, atol=1e-3), (a, b)

    print("KERNEL_OK")
</pallas_src>

<mosaic_0001>
module attributes {stable_mosaic.version = 11 : i64} {
  func.func @_artery_loss_kernel(%arg0: i32, %arg1: i32, %arg2: memref<2xi32, #tpu.memory_space<smem>>, %arg3: memref<32x128xf32, #tpu.memory_space<vmem>>, %arg4: memref<32x128xf32, #tpu.memory_space<vmem>>, %arg5: memref<32x128xf32, #tpu.memory_space<vmem>>, %arg6: memref<32x128xf32, #tpu.memory_space<vmem>>, %arg7: memref<1x3x8x128xf32, #tpu.memory_space<vmem>>) attributes {dimension_semantics = [#tpu.dimension_semantics<parallel>, #tpu.dimension_semantics<arbitrary>], iteration_bounds = array<i64: 1, 1>, scalar_prefetch = 1 : i64, scratch_operands = 0 : i64, tpu.core_type = #tpu.core_type<tc>, window_params = [{transform_indices = @transform_0, window_bounds = array<i64: 32, 128>}, {transform_indices = @transform_1, window_bounds = array<i64: 32, 128>}, {transform_indices = @transform_2, window_bounds = array<i64: 32, 128>}, {transform_indices = @transform_3, window_bounds = array<i64: 32, 128>}, {transform_indices = @transform_4, window_bounds = array<i64: 1, 3, 8, 128>}]} {
    %c1_i32 = arith.constant 1 : i32
    %0 = arith.muli %arg0, %c1_i32 : i32
    %1 = arith.addi %0, %arg1 : i32
    %c0_i32 = arith.constant 0 : i32
    %2 = arith.cmpi eq, %arg1, %c0_i32 : i32
    %3 = arith.extui %2 : i1 to i32
    %c0_i32_0 = arith.constant 0 : i32
    %4 = arith.cmpi ne, %3, %c0_i32_0 : i32
    scf.if %4 {
      %cst_48 = arith.constant 0.000000e+00 : f32
      %81 = vector.broadcast %cst_48 : f32 to vector<1x3x8x128xf32>
      %c0_49 = arith.constant 0 : index
      %c0_50 = arith.constant 0 : index
      %c0_51 = arith.constant 0 : index
      %c0_52 = arith.constant 0 : index
      %82 = vector.load %arg7[%c0_49, %c0_50, %c0_51, %c0_52] : memref<1x3x8x128xf32, #tpu.memory_space<vmem>>, vector<1x3x8x128xf32>
      tpu.vector_store %arg7[%c0_49, %c0_50, %c0_51, %c0_52], %81 {strides = array<i32>} : memref<1x3x8x128xf32, #tpu.memory_space<vmem>>, vector<1x3x8x128xf32>,
    } else {
    }
    %c0 = arith.constant 0 : index
    %5 = memref.load %arg2[%c0] : memref<2xi32, #tpu.memory_space<smem>>
    %c1 = arith.constant 1 : index
    %6 = memref.load %arg2[%c1] : memref<2xi32, #tpu.memory_space<smem>>
    %7 = tpu.iota {dimensions = array<i32: 0>} : vector<32x128xi32>
    %c32_i32 = arith.constant 32 : i32
    %8 = arith.muli %1, %c32_i32 : i32
    %9 = vector.broadcast %8 : i32 to vector<32x128xi32>
    %10 = arith.addi %9, %7 : vector<32x128xi32>
    %11 = vector.broadcast %5 : i32 to vector<32x128xi32>
    %12 = arith.cmpi slt, %10, %11 : vector<32x128xi32>
    %c0_1 = arith.constant 0 : index
    %c0_2 = arith.constant 0 : index
    %13 = vector.load %arg3[%c0_1, %c0_2] : memref<32x128xf32, #tpu.memory_space<vmem>>, vector<32x128xf32>
    %c0_3 = arith.constant 0 : index
    %c0_4 = arith.constant 0 : index
    %14 = vector.load %arg4[%c0_3, %c0_4] : memref<32x128xf32, #tpu.memory_space<vmem>>, vector<32x128xf32>
    %cst = arith.constant 1.000000e+00 : f32
    %15 = vector.broadcast %cst : f32 to vector<32x128xf32>
    %16 = arith.select %12, %13, %15 : vector<32x128xi1>, vector<32x128xf32>
    %cst_5 = arith.constant 1.000000e+00 : f32
    %17 = vector.broadcast %cst_5 : f32 to vector<32x128xf32>
    %18 = arith.select %12, %14, %17 : vector<32x128xi1>, vector<32x128xf32>
    %19 = math.log %16 : vector<32x128xf32>
    %cst_6 = arith.constant -1.000000e+02 : f32
    %20 = vector.broadcast %cst_6 : f32 to vector<32x128xf32>
    %21 = arith.maximumf %19, %20 : vector<32x128xf32>
    %cst_7 = arith.constant 1.000000e+00 : f32
    %22 = vector.broadcast %cst_7 : f32 to vector<32x128xf32>
    %23 = arith.subf %22, %16 : vector<32x128xf32>
    %24 = math.log %23 : vector<32x128xf32>
    %cst_8 = arith.constant -1.000000e+02 : f32
    %25 = vector.broadcast %cst_8 : f32 to vector<32x128xf32>
    %26 = arith.maximumf %24, %25 : vector<32x128xf32>
    %27 = arith.mulf %18, %21 : vector<32x128xf32>
    %cst_9 = arith.constant 1.000000e+00 : f32
    %28 = vector.broadcast %cst_9 : f32 to vector<32x128xf32>
    %29 = arith.subf %28, %18 : vector<32x128xf32>
    %30 = arith.mulf %29, %26 : vector<32x128xf32>
    %31 = arith.addf %27, %30 : vector<32x128xf32>
    %cst_10 = arith.constant 0.000000e+00 : f32
    %32 = vector.broadcast %cst_10 : f32 to vector<32x128xf32>
    %33 = arith.subf %32, %31 : vector<32x128xf32>
    %cst_11 = arith.constant 5.000000e-01 : f32
    %34 = vector.broadcast %cst_11 : f32 to vector<32x128xf32>
    %35 = arith.cmpf ogt, %14, %34 : vector<32x128xf32>
    %36 = arith.andi %12, %35 : vector<32x128xi1>
    %cst_12 = arith.constant 1.000000e+00 : f32
    %cst_13 = arith.constant 0.000000e+00 : f32
    %37 = vector.broadcast %cst_12 : f32 to vector<32x128xf32>
    %38 = vector.broadcast %cst_13 : f32 to vector<32x128xf32>
    %39 = arith.select %36, %37, %38 : vector<32x128xi1>, vector<32x128xf32>
    %cst_14 = arith.constant 2.000000e+00 : f32
    %40 = vector.broadcast %cst_14 : f32 to vector<32x128xf32>
    %41 = arith.mulf %40, %39 : vector<32x128xf32>
    %cst_15 = arith.constant 1.000000e+00 : f32
    %42 = vector.broadcast %cst_15 : f32 to vector<32x128xf32>
    %43 = arith.addf %42, %41 : vector<32x128xf32>
    %44 = arith.mulf %33, %43 : vector<32x128xf32>
    %c0_16 = arith.constant 0 : index
    %c0_17 = arith.constant 0 : index
    %c0_18 = arith.constant 0 : index
    %c0_19 = arith.constant 0 : index
    %45 = vector.load %arg7[%c0_16, %c0_17, %c0_18, %c0_19] : memref<1x3x8x128xf32, #tpu.memory_space<vmem>>, vector<1x1x8x128xf32>
    %46 = vector.shape_cast %45 : vector<1x1x8x128xf32> to vector<8x128xf32>
    %47 = vector.shape_cast %44 : vector<32x128xf32> to vector<4x8x128xf32>
    %cst_20 = arith.constant dense<0.000000e+00> : vector<8x128xf32>
    %48 = vector.multi_reduction <add>, %47, %cst_20 [0] : vector<4x8x128xf32> to vector<8x128xf32>
    %49 = arith.addf %46, %48 : vector<8x128xf32>
    %c0_21 = arith.constant 0 : index
    %c0_22 = arith.constant 0 : index
    %c0_23 = arith.constant 0 : index
    %c0_24 = arith.constant 0 : index
    %50 = vector.load %arg7[%c0_21, %c0_22, %c0_23, %c0_24] : memref<1x3x8x128xf32, #tpu.memory_space<vmem>>, vector<1x1x8x128xf32>
    %51 = vector.shape_cast %50 : vector<1x1x8x128xf32> to vector<8x128xf32>
    %52 = vector.shape_cast %49 : vector<8x128xf32> to vector<1x1x8x128xf32>
    tpu.vector_store %arg7[%c0_21, %c0_22, %c0_23, %c0_24], %52 {strides = array<i32>} : memref<1x3x8x128xf32, #tpu.memory_space<vmem>>, vector<1x1x8x128xf32>,
    %c0_25 = arith.constant 0 : index
    %c1_26 = arith.constant 1 : index
    %c0_27 = arith.constant 0 : index
    %c0_28 = arith.constant 0 : index
    %53 = vector.load %arg7[%c0_25, %c1_26, %c0_27, %c0_28] : memref<1x3x8x128xf32, #tpu.memory_space<vmem>>, vector<1x1x8x128xf32>
    %54 = vector.shape_cast %53 : vector<1x1x8x128xf32> to vector<8x128xf32>
    %55 = vector.shape_cast %39 : vector<32x128xf32> to vector<4x8x128xf32>
    %cst_29 = arith.constant dense<0.000000e+00> : vector<8x128xf32>
    %56 = vector.multi_reduction <add>, %55, %cst_29 [0] : vector<4x8x128xf32> to vector<8x128xf32>
    %57 = arith.addf %54, %56 : vector<8x128xf32>
    %c0_30 = arith.constant 0 : index
    %c1_31 = arith.constant 1 : index
    %c0_32 = arith.constant 0 : index
    %c0_33 = arith.constant 0 : index
    %58 = vector.load %arg7[%c0_30, %c1_31, %c0_32, %c0_33] : memref<1x3x8x128xf32, #tpu.memory_space<vmem>>, vector<1x1x8x128xf32>
    %59 = vector.shape_cast %58 : vector<1x1x8x128xf32> to vector<8x128xf32>
    %60 = vector.shape_cast %57 : vector<8x128xf32> to vector<1x1x8x128xf32>
    tpu.vector_store %arg7[%c0_30, %c1_31, %c0_32, %c0_33], %60 {strides = array<i32>} : memref<1x3x8x128xf32, #tpu.memory_space<vmem>>, vector<1x1x8x128xf32>,
    %61 = tpu.iota {dimensions = array<i32: 0>} : vector<32x128xi32>
    %c32_i32_34 = arith.constant 32 : i32
    %62 = arith.muli %1, %c32_i32_34 : i32
    %63 = vector.broadcast %62 : i32 to vector<32x128xi32>
    %64 = arith.addi %63, %61 : vector<32x128xi32>
    %65 = vector.broadcast %6 : i32 to vector<32x128xi32>
    %66 = arith.cmpi slt, %64, %65 : vector<32x128xi32>
    %c0_35 = arith.constant 0 : index
    %c0_36 = arith.constant 0 : index
    %67 = vector.load %arg5[%c0_35, %c0_36] : memref<32x128xf32, #tpu.memory_space<vmem>>, vector<32x128xf32>
    %c0_37 = arith.constant 0 : index
    %c0_38 = arith.constant 0 : index
    %68 = vector.load %arg6[%c0_37, %c0_38] : memref<32x128xf32, #tpu.memory_space<vmem>>, vector<32x128xf32>
    %69 = arith.subf %67, %68 : vector<32x128xf32>
    %70 = math.absf %69 : vector<32x128xf32>
    %cst_39 = arith.constant 0.000000e+00 : f32
    %71 = vector.broadcast %cst_39 : f32 to vector<32x128xf32>
    %72 = arith.select %66, %70, %71 : vector<32x128xi1>, vector<32x128xf32>
    %c0_40 = arith.constant 0 : index
    %c2 = arith.constant 2 : index
    %c0_41 = arith.constant 0 : index
    %c0_42 = arith.constant 0 : index
    %73 = vector.load %arg7[%c0_40, %c2, %c0_41, %c0_42] : memref<1x3x8x128xf32, #tpu.memory_space<vmem>>, vector<1x1x8x128xf32>
    %74 = vector.shape_cast %73 : vector<1x1x8x128xf32> to vector<8x128xf32>
    %75 = vector.shape_cast %72 : vector<32x128xf32> to vector<4x8x128xf32>
    %cst_43 = arith.constant dense<0.000000e+00> : vector<8x128xf32>
    %76 = vector.multi_reduction <add>, %75, %cst_43 [0] : vector<4x8x128xf32> to vector<8x128xf32>
    %77 = arith.addf %74, %76 : vector<8x128xf32>
    %c0_44 = arith.constant 0 : index
    %c2_45 = arith.constant 2 : index
    %c0_46 = arith.constant 0 : index
    %c0_47 = arith.constant 0 : index
    %78 = vector.load %arg7[%c0_44, %c2_45, %c0_46, %c0_47] : memref<1x3x8x128xf32, #tpu.memory_space<vmem>>, vector<1x1x8x128xf32>
    %79 = vector.shape_cast %78 : vector<1x1x8x128xf32> to vector<8x128xf32>
    %80 = vector.shape_cast %77 : vector<8x128xf32> to vector<1x1x8x128xf32>
    tpu.vector_store %arg7[%c0_44, %c2_45, %c0_46, %c0_47], %80 {strides = array<i32>} : memref<1x3x8x128xf32, #tpu.memory_space<vmem>>, vector<1x1x8x128xf32>,
    return
  }
  func.func @transform_0(%arg0: i32, %arg1: i32, %arg2: memref<2xi32, #tpu.memory_space<smem>>) -> (i32, i32) {
    %c1_i32 = arith.constant 1 : i32
    %0 = arith.muli %arg0, %c1_i32 : i32
    %1 = arith.addi %0, %arg1 : i32
    %c0_i32 = arith.constant 0 : i32
    %2 = arith.minsi %1, %c0_i32 : i32
    %c0_i32_0 = arith.constant 0 : i32
    %c0_i32_1 = arith.constant 0 : i32
    return %2, %c0_i32_0 : i32, i32
  }
  func.func @transform_1(%arg0: i32, %arg1: i32, %arg2: memref<2xi32, #tpu.memory_space<smem>>) -> (i32, i32) {
    %c1_i32 = arith.constant 1 : i32
    %0 = arith.muli %arg0, %c1_i32 : i32
    %1 = arith.addi %0, %arg1 : i32
    %c0_i32 = arith.constant 0 : i32
    %2 = arith.minsi %1, %c0_i32 : i32
    %c0_i32_0 = arith.constant 0 : i32
    %c0_i32_1 = arith.constant 0 : i32
    return %2, %c0_i32_0 : i32, i32
  }
  func.func @transform_2(%arg0: i32, %arg1: i32, %arg2: memref<2xi32, #tpu.memory_space<smem>>) -> (i32, i32) {
    %c1_i32 = arith.constant 1 : i32
    %0 = arith.muli %arg0, %c1_i32 : i32
    %1 = arith.addi %0, %arg1 : i32
    %c0_i32 = arith.constant 0 : i32
    %2 = arith.minsi %1, %c0_i32 : i32
    %c0_i32_0 = arith.constant 0 : i32
    %c0_i32_1 = arith.constant 0 : i32
    return %2, %c0_i32_0 : i32, i32
  }
  func.func @transform_3(%arg0: i32, %arg1: i32, %arg2: memref<2xi32, #tpu.memory_space<smem>>) -> (i32, i32) {
    %c1_i32 = arith.constant 1 : i32
    %0 = arith.muli %arg0, %c1_i32 : i32
    %1 = arith.addi %0, %arg1 : i32
    %c0_i32 = arith.constant 0 : i32
    %2 = arith.minsi %1, %c0_i32 : i32
    %c0_i32_0 = arith.constant 0 : i32
    %c0_i32_1 = arith.constant 0 : i32
    return %2, %c0_i32_0 : i32, i32
  }
  func.func @transform_4(%arg0: i32, %arg1: i32, %arg2: memref<2xi32, #tpu.memory_space<smem>>) -> (i32, i32, i32, i32) {
    %c0_i32 = arith.constant 0 : i32
    %c0_i32_0 = arith.constant 0 : i32
    %c0_i32_1 = arith.constant 0 : i32
    %c0_i32_2 = arith.constant 0 : i32
    return %arg0, %c0_i32, %c0_i32_0, %c0_i32_1 : i32, i32, i32, i32
  }
}

</mosaic_0001>

<llo_original>
// kernel: tpu_custom_call.1
$region0: #{tpu_custom_call.1}
  #allocation0 [shape = 'u32[]', space=smem, size = 0x4, offset = 0x4, fixed_abs, tag = 'smem constant byte address 0x4 - core index']
  #allocation1 [shape = 'u32[144,128]{1,0:T(1,128)}', space=vmem, size = 0x12000, scoped, tag = 'internal scratch']
  #allocation2 [shape = 's32[1]{0}', space=sflag, size = 0x4, scoped, tag = 'scoped memory for tpu_custom_call.1']
  #allocation3 [shape = 'u8[512]{0}', space=smem, size = 0x200, scoped, tag = 'prefetched SMEM operand 0']
  %s0 = inlined_call_operand.hbm [shape: s32[2], index: 0, kind: input, shape index: {}]
  %s1 = inlined_call_operand.hbm [shape: f32[32,128], index: 1, kind: input, shape index: {}]
  %s2 = inlined_call_operand.hbm [shape: f32[32,128], index: 2, kind: input, shape index: {}]
  %s3 = inlined_call_operand.hbm [shape: f32[32,128], index: 3, kind: input, shape index: {}]
  %s4 = inlined_call_operand.hbm [shape: f32[32,128], index: 4, kind: input, shape index: {}]
  %s5 = inlined_call_operand.hbm [shape: f32[1,3,8,128], index: 5, kind: output, shape index: {}]
  %s6 = sld [smem:[#allocation0]]
  $region46: #{tpu_custom_call.1} parent=0
    _
  %s8 = ssub.s32 1, %s6
  %s9 = scalar_select 0, %s8, %s6
  %11 = dma.hbm_to_smem %s0, 16, [#allocation3], [#allocation2]
  %12 = dma.done [#allocation2], 16
  %13 = sfence
  $region1: #{tpu_custom_call.1} parent=0
    #allocation4 [shape = 'u8[16384]{0}', space=vmem, size = 0x4000, scoped, tag = 'input window, operand 1, single buffered']
    #allocation5 [shape = 's32[1]{0}', space=sflag, size = 0x4, scoped, tag = 'scoped memory for tpu_custom_call.1']
    #allocation6 [shape = 's32[1]{0}', space=sflag, size = 0x4, scoped, tag = 'scoped memory for tpu_custom_call.1']
    #allocation7 [shape = 'u8[16384]{0}', space=vmem, size = 0x4000, scoped, tag = 'input window, operand 2, single buffered']
    #allocation8 [shape = 's32[1]{0}', space=sflag, size = 0x4, scoped, tag = 'scoped memory for tpu_custom_call.1']
    #allocation9 [shape = 'u8[16384]{0}', space=vmem, size = 0x4000, scoped, tag = 'input window, operand 3, single buffered']
    #allocation10 [shape = 'u8[16384]{0}', space=vmem, size = 0x4000, scoped, tag = 'input window, operand 4, single buffered']
    #allocation11 [shape = 's32[1]{0}', space=sflag, size = 0x4, scoped, tag = 'scoped memory for tpu_custom_call.1']
    #allocation12 [shape = 'u8[12288]{0}', space=vmem, size = 0x3000, scoped, tag = 'output window, operand 0, single buffered']
    %14 = vsyncpa [#allocation5], 0
    %15 = vsyncpa [#allocation8], 0
    %16 = vsyncpa [#allocation11], 0
    %17 = vsyncpa [#allocation6], 0
    // Predicated region
    $region2: #{tpu_custom_call.1} parent=1 // pred_check
      _
    $region3: #{tpu_custom_call.1} parent=1 // pred_check_branch
      %19 = sbr.rel (0) target = $region5
    $region4: #{tpu_custom_call.1} parent=1 // pred_region
      %s20 = sadd.s32 0, 0
      %p21 = scmp.lt.s32.totalorder %s20, 0
      %s22 = scalar_select %p21, %s20, 0
      %s23 = smul.u32 4, %s22
      %s25 = ssub.s32 512, 512
      %26 = vsyncadd [#allocation5], %s25
      %s27 = smul.addr %s23, 128
      %s28 = scalar_lea.hbm %s1, %s27
      %s29 = sshll.u32 [#allocation4], 4
      %s30 = int_to_ptr.vmem [resolvable:$true] %s29
      %35 = dma.hbm_to_vmem [thread:$0]  %s28, 512, %s30, [#allocation5], 128, 128, 8
    $region5: #{tpu_custom_call.1} parent=1 // pred_fallthru
      _
    // Predicated region
    $region6: #{tpu_custom_call.1} parent=1 // pred_check
      _
    $region7: #{tpu_custom_call.1} parent=1 // pred_check_branch
      %37 = sbr.rel (0) target = $region9
    $region8: #{tpu_custom_call.1} parent=1 // pred_region
      %s38 = sadd.s32 0, 0
      %p39 = scmp.lt.s32.totalorder %s38, 0
      %s40 = scalar_select %p39, %s38, 0
      %s41 = smul.u32 4, %s40
      %s43 = ssub.s32 512, 512
      %44 = vsyncadd [#allocation8], %s43
      %s45 = smul.addr %s41, 128
      %s46 = scalar_lea.hbm %s2, %s45
      %s47 = sshll.u32 [#allocation7], 4
      %s48 = int_to_ptr.vmem [resolvable:$true] %s47
      %53 = dma.hbm_to_vmem [thread:$0]  %s46, 512, %s48, [#allocation8], 128, 128, 8
    $region9: #{tpu_custom_call.1} parent=1 // pred_fallthru
      _
    // Predicated region
    $region10: #{tpu_custom_call.1} parent=1 // pred_check
      _
    $region11: #{tpu_custom_call.1} parent=1 // pred_check_branch
      %55 = sbr.rel (0) target = $region13
    $region12: #{tpu_custom_call.1} parent=1 // pred_region
      %s56 = sadd.s32 0, 0
      %p57 = scmp.lt.s32.totalorder %s56, 0
      %s58 = scalar_select %p57, %s56, 0
      %s59 = smul.u32 4, %s58
      %s61 = ssub.s32 512, 512
      %62 = vsyncadd [#allocation8], %s61
      %s63 = smul.addr %s59, 128
      %s64 = scalar_lea.hbm %s3, %s63
      %s65 = sshll.u32 [#allocation9], 4
      %s66 = int_to_ptr.vmem [resolvable:$true] %s65
      %71 = dma.hbm_to_vmem [thread:$0]  %s64, 512, %s66, [#allocation8], 128, 128, 8
    $region13: #{tpu_custom_call.1} parent=1 // pred_fallthru
      _
    // Predicated region
    $region14: #{tpu_custom_call.1} parent=1 // pred_check
      _
    $region15: #{tpu_custom_call.1} parent=1 // pred_check_branch
      %73 = sbr.rel (0) target = $region17
    $region16: #{tpu_custom_call.1} parent=1 // pred_region
      %s74 = sadd.s32 0, 0
      %p75 = scmp.lt.s32.totalorder %s74, 0
      %s76 = scalar_select %p75, %s74, 0
      %s77 = smul.u32 4, %s76
      %s79 = ssub.s32 512, 512
      %80 = vsyncadd [#allocation11], %s79
      %s81 = smul.addr %s77, 128
      %s82 = scalar_lea.hbm %s4, %s81
      %s83 = sshll.u32 [#allocation10], 4
      %s84 = int_to_ptr.vmem [resolvable:$true] %s83
      %89 = dma.hbm_to_vmem [thread:$0]  %s82, 512, %s84, [#allocation11], 128, 128, 8
    $region17: #{tpu_custom_call.1} parent=1 // pred_fallthru
      _
    // Predicated region
    $region18: #{tpu_custom_call.1} parent=1 // pred_check
      _
    $region19: #{tpu_custom_call.1} parent=1 // pred_check_branch
      %91 = sbr.rel (0) target = $region21
    $region20: #{tpu_custom_call.1} parent=1 // pred_region
      %92 = dma.done [#allocation5], 512
    $region21: #{tpu_custom_call.1} parent=1 // pred_fallthru
      _
    // Predicated region
    $region22: #{tpu_custom_call.1} parent=1 // pred_check
      _
    $region23: #{tpu_custom_call.1} parent=1 // pred_check_branch
      %94 = sbr.rel (0) target = $region25
    $region24: #{tpu_custom_call.1} parent=1 // pred_region
      %95 = dma.done [#allocation8], 512
    $region25: #{tpu_custom_call.1} parent=1 // pred_fallthru
      _
    // Predicated region
    $region26: #{tpu_custom_call.1} parent=1 // pred_check
      _
    $region27: #{tpu_custom_call.1} parent=1 // pred_check_branch
      %97 = sbr.rel (0) target = $region29
    $region28: #{tpu_custom_call.1} parent=1 // pred_region
      %98 = dma.done [#allocation8], 512
    $region29: #{tpu_custom_call.1} parent=1 // pred_fallthru
      _
    // Predicated region
    $region30: #{tpu_custom_call.1} parent=1 // pred_check
      _
    $region31: #{tpu_custom_call.1} parent=1 // pred_check_branch
      %100 = sbr.rel (0) target = $region33
    $region32: #{tpu_custom_call.1} parent=1 // pred_region
      %101 = dma.done [#allocation11], 512
    $region33: #{tpu_custom_call.1} parent=1 // pred_fallthru
      _
    %s102 = sadd.s32 0, 0
    %p103 = scmp.lt.s32.totalorder %s102, 0
    %s104 = scalar_select %p103, %s102, 0
    %s105 = smul.u32 4, %s104
    %s106 = sadd.s32 0, 0
    %p107 = scmp.lt.s32.totalorder %s106, 0
    %s108 = scalar_select %p107, %s106, 0
    %s109 = smul.u32 4, %s108
    %s110 = sadd.s32 0, 0
    %p111 = scmp.lt.s32.totalorder %s110, 0
    %s112 = scalar_select %p111, %s110, 0
    %s113 = smul.u32 4, %s112
    %s114 = sadd.s32 0, 0
    %p115 = scmp.lt.s32.totalorder %s114, 0
    %s116 = scalar_select %p115, %s114, 0
    %s117 = smul.u32 4, %s116
    %s118 = sadd.s32 0, 0
    %p119 = scmp.eq.s32.totalorder 0, 0
    // Predicated region
    $region34: #{tpu_custom_call.1} parent=1 // pred_check
      %p120 = pneg %p119
    $region35: #{tpu_custom_call.1} parent=1 // pred_check_branch
      %122 = sbr.rel (%p120) target = $region37
    $region36: #{tpu_custom_call.1} parent=1 // pred_region
      %123 = vst [vmem:[#allocation12] sm:$0xff] 0.0
      %124 = vst [vmem:[#allocation12 + $0x8] sm:$0xff] 0.0
      %125 = vst [vmem:[#allocation12 + $0x10] sm:$0xff] 0.0
    $region37: #{tpu_custom_call.1} parent=1 // pred_fallthru
      _
    %s126 = sld [smem:[#allocation3]]
    %s127 = sld [smem:[#allocation3 + $0x1]]
    %v128 = vlaneseq
    %v129 = vshrl.u32 %v128, 7
    %v130 = vadd.s32 %v129, 8
    %v131 = vadd.s32 %v129, 16
    %v132 = vadd.s32 %v129, 24
    %s133 = smul.u32 %s118, 32
    %v134 = vstv %s133
    %v135 = vadd.s32 %v134, %v129
    %v136 = vadd.s32 %v134, %v130
    %v137 = vadd.s32 %v134, %v131
    %v138 = vadd.s32 %v134, %v132
    %v139 = vstv %s126
    %vm140 = vcmp.lt.s32.totalorder %v135, %v139
    %vm141 = vcmp.lt.s32.totalorder %v136, %v139
    %vm142 = vcmp.lt.s32.totalorder %v137, %v139
    %vm143 = vcmp.lt.s32.totalorder %v138, %v139
    %v144 = vld [vmem:[#allocation4] sm:$0xff]
    %v145 = vld [vmem:[#allocation4 + $0x8] sm:$0xff]
    %v146 = vld [vmem:[#allocation4 + $0x10] sm:$0xff]
    %v147 = vld [vmem:[#allocation4 + $0x18] sm:$0xff]
    %v148 = vld [vmem:[#allocation7] sm:$0xff]
    %v149 = vld [vmem:[#allocation7 + $0x8] sm:$0xff]
    %v150 = vld [vmem:[#allocation7 + $0x10] sm:$0xff]
    %v151 = vld [vmem:[#allocation7 + $0x18] sm:$0xff]
    %v152 = vsel %vm140, %v144, 1.0
    %v153 = vsel %vm141, %v145, 1.0
    %v154 = vsel %vm142, %v146, 1.0
    %v155 = vsel %vm143, %v147, 1.0
    %v156 = vsel %vm140, %v148, 1.0
    %v157 = vsel %vm141, %v149, 1.0
    %v158 = vsel %vm142, %v150, 1.0
    %v159 = vsel %vm143, %v151, 1.0
    %v160 = vlog2.pop %v152
    %v161 = vmul.f32 %v160, 0.6931472
    %v162 = vlog2.pop %v153
    %v163 = vmul.f32 %v162, 0.6931472
    %v164 = vlog2.pop %v154
    %v165 = vmul.f32 %v164, 0.6931472
    %v166 = vlog2.pop %v155
    %v167 = vmul.f32 %v166, 0.6931472
    %v168 = vmax.f32 %v161, -100.0
    %v169 = vmax.f32 %v163, -100.0
    %v170 = vmax.f32 %v165, -100.0
    %v171 = vmax.f32 %v167, -100.0
    %v172 = vsub.f32 1.0, %v152
    %v173 = vsub.f32 1.0, %v153
    %v174 = vsub.f32 1.0, %v154
    %v175 = vsub.f32 1.0, %v155
    %v176 = vlog2.pop %v172
    %v177 = vmul.f32 %v176, 0.6931472
    %v178 = vlog2.pop %v173
    %v179 = vmul.f32 %v178, 0.6931472
    %v180 = vlog2.pop %v174
    %v181 = vmul.f32 %v180, 0.6931472
    %v182 = vlog2.pop %v175
    %v183 = vmul.f32 %v182, 0.6931472
    %v184 = vmax.f32 %v177, -100.0
    %v185 = vmax.f32 %v179, -100.0
    %v186 = vmax.f32 %v181, -100.0
    %v187 = vmax.f32 %v183, -100.0
    %v188 = vmul.f32 %v156, %v168
    %v189 = vmul.f32 %v157, %v169
    %v190 = vmul.f32 %v158, %v170
    %v191 = vmul.f32 %v159, %v171
    %v192 = vsub.f32 1.0, %v156
    %v193 = vsub.f32 1.0, %v157
    %v194 = vsub.f32 1.0, %v158
    %v195 = vsub.f32 1.0, %v159
    %v196 = vmul.f32 %v192, %v184
    %v197 = vmul.f32 %v193, %v185
    %v198 = vmul.f32 %v194, %v186
    %v199 = vmul.f32 %v195, %v187
    %v200 = vadd.f32 %v188, %v196
    %v201 = vadd.f32 %v189, %v197
    %v202 = vadd.f32 %v190, %v198
    %v203 = vadd.f32 %v191, %v199
    %v204 = vsub.f32 0.0, %v200
    %v205 = vsub.f32 0.0, %v201
    %v206 = vsub.f32 0.0, %v202
    %v207 = vsub.f32 0.0, %v203
    %vm208 = vcmp.gt.f32.partialorder %v148, 0.5
    %vm209 = vcmp.gt.f32.partialorder %v149, 0.5
    %vm210 = vcmp.gt.f32.partialorder %v150, 0.5
    %vm211 = vcmp.gt.f32.partialorder %v151, 0.5
    %vm212 = vmand %vm140, %vm208
    %vm213 = vmand %vm141, %vm209
    %vm214 = vmand %vm142, %vm210
    %vm215 = vmand %vm143, %vm211
    %v216 = vsel %vm212, 1.0, 0.0
    %v217 = vsel %vm213, 1.0, 0.0
    %v218 = vsel %vm214, 1.0, 0.0
    %v219 = vsel %vm215, 1.0, 0.0
    %v220 = vmul.f32 %v216, 2.0
    %v221 = vmul.f32 %v217, 2.0
    %v222 = vmul.f32 %v218, 2.0
    %v223 = vmul.f32 %v219, 2.0
    %v224 = vadd.f32 %v220, 1.0
    %v225 = vadd.f32 %v221, 1.0
    %v226 = vadd.f32 %v222, 1.0
    %v227 = vadd.f32 %v223, 1.0
    %v228 = vmul.f32 %v204, %v224
    %v229 = vmul.f32 %v205, %v225
    %v230 = vmul.f32 %v206, %v226
    %v231 = vmul.f32 %v207, %v227
    %v232 = vld [vmem:[#allocation12] sm:$0xff]
    %v233 = vadd.f32 %v228, %v229
    %v234 = vadd.f32 %v233, %v230
    %v235 = vadd.f32 %v234, %v231
    %v236 = vadd.f32 %v232, %v235
    %237 = vst [vmem:[#allocation12] sm:$0xff] %v236
    %s238 = scalar_lea.vmem [#allocation12], 8
    %v239 = vld [vmem:[%s238] sm:$0xff]
    %v240 = vadd.f32 %v216, %v217
    %v241 = vadd.f32 %v240, %v218
    %v242 = vadd.f32 %v241, %v219
    %v243 = vadd.f32 %v239, %v242
    %244 = vst [vmem:[%s238] sm:$0xff] %v243
    %v245 = vstv %s127
    %vm246 = vcmp.lt.s32.totalorder %v135, %v245
    %vm247 = vcmp.lt.s32.totalorder %v136, %v245
    %vm248 = vcmp.lt.s32.totalorder %v137, %v245
    %vm249 = vcmp.lt.s32.totalorder %v138, %v245
    %v250 = vld [vmem:[#allocation9] sm:$0xff]
    %v251 = vld [vmem:[#allocation9 + $0x8] sm:$0xff]
    %v252 = vld [vmem:[#allocation9 + $0x10] sm:$0xff]
    %v253 = vld [vmem:[#allocation9 + $0x18] sm:$0xff]
    %v254 = vld [vmem:[#allocation10] sm:$0xff]
    %v255 = vld [vmem:[#allocation10 + $0x8] sm:$0xff]
    %v256 = vld [vmem:[#allocation10 + $0x10] sm:$0xff]
    %v257 = vld [vmem:[#allocation10 + $0x18] sm:$0xff]
    %v258 = vsub.f32 %v250, %v254
    %v259 = vsub.f32 %v251, %v255
    %v260 = vsub.f32 %v252, %v256
    %v261 = vsub.f32 %v253, %v257
    %v262 = vand.u32 2147483647, %v258
    %v263 = vand.u32 2147483647, %v259
    %v264 = vand.u32 2147483647, %v260
    %v265 = vand.u32 2147483647, %v261
    %v266 = vsel %vm246, %v262, 0.0
    %v267 = vsel %vm247, %v263, 0.0
    %v268 = vsel %vm248, %v264, 0.0
    %v269 = vsel %vm249, %v265, 0.0
    %s270 = scalar_lea.vmem [#allocation12], 16
    %v271 = vld [vmem:[%s270] sm:$0xff]
    %v272 = vadd.f32 %v266, %v267
    %v273 = vadd.f32 %v272, %v268
    %v274 = vadd.f32 %v273, %v269
    %v275 = vadd.f32 %v271, %v274
    %276 = vst [vmem:[%s270] sm:$0xff] %v275
    // Predicated region
    $region38: #{tpu_custom_call.1} parent=1 // pred_check
      _
    $region39: #{tpu_custom_call.1} parent=1 // pred_check_branch
      %278 = sbr.rel (0) target = $region41
    $region40: #{tpu_custom_call.1} parent=1 // pred_region
      %s280 = ssub.s32 384, 384
      %281 = vsyncadd [#allocation6], %s280
      %s282 = sshll.u32 [#allocation12], 4
      %s283 = int_to_ptr.vmem [resolvable:$true] %s282
      %288 = dma.vmem_to_hbm [thread:$0]  %s283, 384, %s5, [#allocation6], 128, 128, 8
    $region41: #{tpu_custom_call.1} parent=1 // pred_fallthru
      _
    // Predicated region
    $region42: #{tpu_custom_call.1} parent=1 // pred_check
      _
    $region43: #{tpu_custom_call.1} parent=1 // pred_check_branch
      %290 = sbr.rel (0) target = $region45
    $region44: #{tpu_custom_call.1} parent=1 // pred_region
      %291 = dma.done [#allocation6], 384
    $region45: #{tpu_custom_call.1} parent=1 // pred_fallthru
      _
    %292 = vsyncpa [#allocation5], 1
    %293 = vsyncpa [#allocation8], 1
    %294 = vsyncpa [#allocation11], 1
    %295 = vsyncpa [#allocation6], 1

</llo_original>
